<compile_context>
chip_gen: v6e
topology: v6e:2x2x1
jax: 0.10.0
libtpu: 0.0.40
codegen_flags: <defaults>
</compile_context>

<pallas_src>
import jax
import jax.numpy as jnp
from jax.experimental import pallas as pl
from jax.experimental.pallas import tpu as pltpu

_NEG_LARGE = -1e30          # pad-column logit; exp() underflows to exactly 0 in f32
_LANE = 128
_SUBLANE = 8
_VMEM_BUDGET = 48 * 1024 * 1024   # sized against v7x's 64 MiB per-TC VMEM
_MAX_TB = 512


def _round_up(v, m):
    return (v + m - 1) // m * m


def linear_softmax_kernel(x_ref, wt_ref, b_ref, o_ref):
    # logits = x @ W_t + b  -- W_t is pre-transposed [K, N_pad] (MXU-native),
    # accumulation is f32 regardless of the input stream dtype.
    logits = jnp.dot(x_ref[...], wt_ref[...],
                     preferred_element_type=jnp.float32)          # [TB, N_pad] f32
    logits = logits + b_ref[...]                                  # bias is f32

    # Numerically-stable softmax over the lane-dense padded row.
    # Pad columns carry a -1e30 bias, so they contribute exactly 0 to the sum
    # (assumes out_dim >= 1 so at least one real column defines the max).
    m = jnp.max(logits, axis=-1, keepdims=True)
    e = jnp.exp(logits - m)
    s = jnp.sum(e, axis=-1, keepdims=True)
    # Exact VPU divide — approx=True reciprocal is not accurate enough for a
    # 1e-4 tolerance and buys nothing on this overhead/HBM-bound kernel.
    o_ref[...] = (e / s).astype(o_ref.dtype)


def prepare_params(weight, bias, compute_dtype=None):
    """One-time layout plumbing; do NOT run this per forward call.

    weight: [out_dim, in_dim] (PyTorch nn.Linear layout), bias: [out_dim].
    Returns (w_t, bias_p) laid out for the kernel. Pass
    compute_dtype=jnp.bfloat16 to halve weight/x HBM + VMEM traffic (the
    kernel still accumulates in f32).
    """
    out_dim, in_dim = weight.shape
    n_pad = _round_up(out_dim, _LANE)
    if compute_dtype is None:
        compute_dtype = weight.dtype
    w_t = jnp.zeros((in_dim, n_pad), compute_dtype).at[:, :out_dim].set(
        weight.T.astype(compute_dtype))
    bias_p = jnp.full((1, n_pad), _NEG_LARGE, jnp.float32).at[0, :out_dim].set(
        bias.astype(jnp.float32))
    return w_t, bias_p


def _pick_batch_tile(B, in_dim, n_pad, x_itemsize, w_itemsize, out_itemsize):
    """Largest sublane-aligned batch tile that fits the VMEM budget."""
    resident = in_dim * n_pad * w_itemsize + n_pad * 4            # single-buffered W_t + bias
    per_row = 2 * in_dim * x_itemsize + 2 * n_pad * out_itemsize  # double-buffered x / out
    tb = min(_MAX_TB, _round_up(B, _SUBLANE))
    while tb > _SUBLANE and resident + tb * per_row > _VMEM_BUDGET:
        tb = _round_up(tb // 2, _SUBLANE)
    b_pad = _round_up(B, tb)
    # v7x has 2 TensorCores: make sure the "parallel" batch axis has >= 2 grid
    # steps when there is enough work to split.
    if b_pad // tb == 1 and B > _SUBLANE and tb > _SUBLANE:
        tb = _round_up(tb // 2, _SUBLANE)
        b_pad = _round_up(B, tb)
    vmem_needed = resident + tb * per_row
    vmem_limit = int(min(128 << 20, max(32 << 20, vmem_needed * 2)))
    return tb, b_pad, vmem_limit


@jax.jit
def toy_model_forward_padded(x, w_t, bias_p):
    """x: [B, in_dim]; w_t/bias_p from prepare_params().

    Returns the padded [B_pad, N_pad] softmax output (real values in
    [:B, :out_dim], pad columns are exactly 0). Consume it padded when
    possible to avoid an extra full-output memory pass.
    """
    B, in_dim = x.shape
    n_pad = w_t.shape[1]
    out_dtype = x.dtype
    x = x.astype(w_t.dtype)        # feed the MXU the weight's compute dtype

    tb, b_pad, vmem_limit = _pick_batch_tile(
        B, in_dim, n_pad, x.dtype.itemsize, w_t.dtype.itemsize,
        jnp.dtype(out_dtype).itemsize)
    x_p = x if b_pad == B else jnp.zeros((b_pad, in_dim), x.dtype).at[:B].set(x)

    return pl.pallas_call(
        linear_softmax_kernel,
        out_shape=jax.ShapeDtypeStruct((b_pad, n_pad), out_dtype),
        grid_spec=pltpu.PrefetchScalarGridSpec(
            num_scalar_prefetch=0,
            grid=(b_pad // tb,),
            in_specs=[
                # x streams per batch tile (double-buffered by default).
                pl.BlockSpec((tb, in_dim), lambda i: (i, 0)),
                # Grid-invariant weight / bias: single-buffer to reclaim VMEM.
                pl.BlockSpec((in_dim, n_pad), lambda i: (0, 0),
                             pipeline_mode=pl.Buffered(1)),
                pl.BlockSpec((1, n_pad), lambda i: (0, 0),
                             pipeline_mode=pl.Buffered(1)),
            ],
            out_specs=pl.BlockSpec((tb, n_pad), lambda i: (i, 0)),
        ),
        compiler_params=pltpu.CompilerParams(
            # batch axis is independent -> shards across v7x's two TCs,
            # harmless on single-TC v5e/v6e.
            dimension_semantics=("parallel",),
            vmem_limit_bytes=vmem_limit,
        ),
    )(x_p, w_t, bias_p)


def toy_model_forward(x, weight, bias):
    """Convenience path matching the PyTorch module exactly (prep + slice).

    For repeated calls, run prepare_params() once and call
    toy_model_forward_padded() per step instead.
    """
    out_dim = weight.shape[0]
    w_t, bias_p = prepare_params(weight, bias)
    out_padded = toy_model_forward_padded(x, w_t, bias_p)
    return out_padded[:x.shape[0], :out_dim]


if __name__ == "__main__":
    # Small shapes consistent with the module: ToyModel(in_dim=32, out_dim=16)
    B, in_dim, out_dim = 8, 32, 16

    key = jax.random.PRNGKey(0)
    kx, kw, kb = jax.random.split(key, 3)

    x = jax.random.normal(kx, (B, in_dim), dtype=jnp.float32)
    # Deterministic parameter init (uniform like PyTorch's default, scale 1/sqrt(in_dim))
    bound = 1.0 / (in_dim ** 0.5)
    weight = jax.random.uniform(kw, (out_dim, in_dim), jnp.float32, -bound, bound)
    bias = jax.random.uniform(kb, (out_dim,), jnp.float32, -bound, bound)

    # One-time layout prep (hoisted out of the per-call path), then forward.
    w_t, bias_p = prepare_params(weight, bias)
    out_padded = jax.block_until_ready(toy_model_forward_padded(x, w_t, bias_p))
    out = out_padded[:B, :out_dim]   # slice only for the reference comparison

    # sanity: matches reference linear+softmax, rows sum to 1
    ref = jax.nn.softmax(x @ weight.T + bias, axis=-1)
    assert out.shape == (B, out_dim)
    assert jnp.allclose(out, ref, atol=1e-4, rtol=1e-4)
    assert jnp.allclose(jnp.sum(out, axis=-1), 1.0, atol=1e-3)
    # pad columns must be exactly zero
    assert jnp.all(out_padded[:B, out_dim:] == 0.0)

    print("KERNEL_OK")
</pallas_src>

<mosaic_0001>
module attributes {stable_mosaic.version = 11 : i64} {
  func.func @linear_softmax_kernel(%arg0: i32, %arg1: memref<8x32xf32, #tpu.memory_space<vmem>>, %arg2: memref<32x128xf32, #tpu.memory_space<vmem>>, %arg3: memref<1x128xf32, #tpu.memory_space<vmem>>, %arg4: memref<8x128xf32, #tpu.memory_space<vmem>>) attributes {dimension_semantics = [#tpu.dimension_semantics<parallel>], iteration_bounds = array<i64: 1>, scalar_prefetch = 0 : i64, scratch_operands = 0 : i64, tpu.core_type = #tpu.core_type<tc>, window_params = [{transform_indices = @transform_0, window_bounds = array<i64: 8, 32>}, {pipeline_mode = #tpu.pipeline_mode<synchronous>, transform_indices = @transform_1, window_bounds = array<i64: 32, 128>}, {pipeline_mode = #tpu.pipeline_mode<synchronous>, transform_indices = @transform_2, window_bounds = array<i64: 1, 128>}, {transform_indices = @transform_3, window_bounds = array<i64: 8, 128>}]} {
    %c0 = arith.constant 0 : index
    %c0_0 = arith.constant 0 : index
    %0 = vector.load %arg1[%c0, %c0_0] : memref<8x32xf32, #tpu.memory_space<vmem>>, vector<8x32xf32>
    %c0_1 = arith.constant 0 : index
    %c0_2 = arith.constant 0 : index
    %1 = vector.load %arg2[%c0_1, %c0_2] : memref<32x128xf32, #tpu.memory_space<vmem>>, vector<32x128xf32>
    %cst = arith.constant dense<0.000000e+00> : vector<8x128xf32>
    %2 = tpu.matmul %0, %1, %cst {dimension_numbers = #tpu.dot_dimension_numbers<[1], [0], [0], [1], [0, 0, 1, 1], [], []>} : vector<8x32xf32>, vector<32x128xf32>, vector<8x128xf32> -> vector<8x128xf32>
    %c0_3 = arith.constant 0 : index
    %c0_4 = arith.constant 0 : index
    %3 = vector.load %arg3[%c0_3, %c0_4] : memref<1x128xf32, #tpu.memory_space<vmem>>, vector<1x128xf32>
    %4 = vector.broadcast %3 : vector<1x128xf32> to vector<8x128xf32>
    %5 = arith.addf %2, %4 : vector<8x128xf32>
    %cst_5 = arith.constant dense<0xFF800000> : vector<8xf32>
    %6 = vector.multi_reduction <maximumf>, %5, %cst_5 [1] : vector<8x128xf32> to vector<8xf32>
    %7 = vector.shape_cast %6 : vector<8xf32> to vector<8x1xf32>
    %8 = vector.broadcast %7 : vector<8x1xf32> to vector<8x128xf32>
    %9 = arith.subf %5, %8 : vector<8x128xf32>
    %10 = math.exp %9 : vector<8x128xf32>
    %cst_6 = arith.constant dense<0.000000e+00> : vector<8xf32>
    %11 = vector.multi_reduction <add>, %10, %cst_6 [1] : vector<8x128xf32> to vector<8xf32>
    %12 = vector.shape_cast %11 : vector<8xf32> to vector<8x1xf32>
    %13 = vector.broadcast %12 : vector<8x1xf32> to vector<8x128xf32>
    %14 = arith.divf %10, %13 : vector<8x128xf32>
    %c0_7 = arith.constant 0 : index
    %c0_8 = arith.constant 0 : index
    %15 = vector.load %arg4[%c0_7, %c0_8] : memref<8x128xf32, #tpu.memory_space<vmem>>, vector<8x128xf32>
    tpu.vector_store %arg4[%c0_7, %c0_8], %14 {strides = array<i32>} : memref<8x128xf32, #tpu.memory_space<vmem>>, vector<8x128xf32>,
    return
  }
  func.func @transform_0(%arg0: i32) -> (i32, i32) {
    %c0_i32 = arith.constant 0 : i32
    %c0_i32_0 = arith.constant 0 : i32
    return %arg0, %c0_i32 : i32, i32
  }
  func.func @transform_1(%arg0: i32) -> (i32, i32) {
    %c0_i32 = arith.constant 0 : i32
    %c0_i32_0 = arith.constant 0 : i32
    %c0_i32_1 = arith.constant 0 : i32
    return %c0_i32, %c0_i32_0 : i32, i32
  }
  func.func @transform_2(%arg0: i32) -> (i32, i32) {
    %c0_i32 = arith.constant 0 : i32
    %c0_i32_0 = arith.constant 0 : i32
    %c0_i32_1 = arith.constant 0 : i32
    return %c0_i32, %c0_i32_0 : i32, i32
  }
  func.func @transform_3(%arg0: i32) -> (i32, i32) {
    %c0_i32 = arith.constant 0 : i32
    %c0_i32_0 = arith.constant 0 : i32
    return %arg0, %c0_i32 : i32, i32
  }
}

</mosaic_0001>

<llo_original>
// kernel: toy_model_forward_padded.1
$region0: #{toy_model_forward_padded.1}
  #allocation0 [shape = 'u32[]', space=smem, size = 0x4, offset = 0x4, fixed_abs, tag = 'smem constant byte address 0x4 - core index']
  #allocation1 [shape = 'u32[144,128]{1,0:T(1,128)}', space=vmem, size = 0x12000, scoped, tag = 'internal scratch']
  %s0 = inlined_call_operand.hbm [shape: f32[8,32], index: 0, kind: input, shape index: {}]
  %s1 = inlined_call_operand.hbm [shape: f32[32,128], index: 1, kind: input, shape index: {}]
  %s2 = inlined_call_operand.vmem [shape: f32[1,128], index: 2, kind: input, shape index: {}]
  %s3 = inlined_call_operand.hbm [shape: f32[8,128], index: 3, kind: output, shape index: {}]
  %s4 = sld [smem:[#allocation0]]
  $region30: #{toy_model_forward_padded.1} parent=0
    _
  %s6 = ssub.s32 1, %s4
  %s7 = scalar_select 0, %s6, %s4
  $region1: #{toy_model_forward_padded.1} parent=0
    #allocation2 [shape = 'u8[4096]{0}', space=vmem, size = 0x1000, scoped, tag = 'input window, operand 0, single buffered']
    #allocation3 [shape = 's32[1]{0}', space=sflag, size = 0x4, scoped, tag = 'scoped memory for toy_model_forward_padded.1']
    #allocation4 [shape = 's32[1]{0}', space=sflag, size = 0x4, scoped, tag = 'scoped memory for toy_model_forward_padded.1']
    #allocation5 [shape = 'u8[16384]{0}', space=vmem, size = 0x4000, scoped, tag = 'input window, operand 1, single buffered']
    #allocation6 [shape = 's32[1]{0}', space=sflag, size = 0x4, scoped, tag = 'scoped memory for toy_model_forward_padded.1']
    #allocation7 [shape = 'u8[4096]{0}', space=vmem, size = 0x1000, scoped, tag = 'output window, operand 0, single buffered']
    %8 = vsyncpa [#allocation3], 0
    %9 = vsyncpa [#allocation6], 0
    %10 = vsyncpa [#allocation4], 0
    // Predicated region
    $region2: #{toy_model_forward_padded.1} parent=1 // pred_check
      _
    $region3: #{toy_model_forward_padded.1} parent=1 // pred_check_branch
      %12 = sbr.rel (0) target = $region5
    $region4: #{toy_model_forward_padded.1} parent=1 // pred_region
      %s14 = ssub.s32 128, 128
      %15 = vsyncadd [#allocation3], %s14
      %s17 = sshll.u32 [#allocation2], 4
      %s18 = int_to_ptr.vmem [resolvable:$true] %s17
      %20 = dma.hbm_to_vmem [thread:$0]  %s0, 128, %s18, [#allocation3]
    $region5: #{toy_model_forward_padded.1} parent=1 // pred_fallthru
      _
    // Predicated region
    $region6: #{toy_model_forward_padded.1} parent=1 // pred_check
      _
    $region7: #{toy_model_forward_padded.1} parent=1 // pred_check_branch
      %22 = sbr.rel (0) target = $region9
    $region8: #{toy_model_forward_padded.1} parent=1 // pred_region
      %s24 = ssub.s32 512, 512
      %25 = vsyncadd [#allocation6], %s24
      %s26 = sshll.u32 [#allocation5], 4
      %s27 = int_to_ptr.vmem [resolvable:$true] %s26
      %32 = dma.hbm_to_vmem [thread:$0]  %s1, 512, %s27, [#allocation6], 128, 128, 8
    $region9: #{toy_model_forward_padded.1} parent=1 // pred_fallthru
      _
    // Predicated region
    $region10: #{toy_model_forward_padded.1} parent=1 // pred_check
      _
    $region11: #{toy_model_forward_padded.1} parent=1 // pred_check_branch
      %34 = sbr.rel (0) target = $region13
    $region12: #{toy_model_forward_padded.1} parent=1 // pred_region
      _
    $region13: #{toy_model_forward_padded.1} parent=1 // pred_fallthru
      _
    // Predicated region
    $region14: #{toy_model_forward_padded.1} parent=1 // pred_check
      _
    $region15: #{toy_model_forward_padded.1} parent=1 // pred_check_branch
      %36 = sbr.rel (0) target = $region17
    $region16: #{toy_model_forward_padded.1} parent=1 // pred_region
      %37 = dma.done [#allocation3], 128
    $region17: #{toy_model_forward_padded.1} parent=1 // pred_fallthru
      _
    // Predicated region
    $region18: #{toy_model_forward_padded.1} parent=1 // pred_check
      _
    $region19: #{toy_model_forward_padded.1} parent=1 // pred_check_branch
      %39 = sbr.rel (0) target = $region21
    $region20: #{toy_model_forward_padded.1} parent=1 // pred_region
      %40 = dma.done [#allocation6], 512
    $region21: #{toy_model_forward_padded.1} parent=1 // pred_fallthru
      _
    %v41 = vld [vmem:[#allocation2] sm:$0xff]
    %v42 = vld [vmem:[#allocation5] sm:$0xff]
    %v43 = vld [vmem:[#allocation5 + $0x8] sm:$0xff]
    %v44 = vld [vmem:[#allocation5 + $0x10] sm:$0xff]
    %v45 = vld [vmem:[#allocation5 + $0x18] sm:$0xff]
    %v46 = vld [vmem:[%s2] sm:$0x1]
    %v48 = vlaneseq
    %v49 = vshrl.u32 %v48, 7
    %v50 = vsub.s32 0, %v49
    %v51 = vrot.slane %v46, %v50
    %vm53 = vcmask 261120
    %v55 = vsel %vm53, %v41, 0
    %57 = vmatprep.subr.mxu0 0.0
    %58 = vmatpush1.msra.mxu0 0.0
    %59 = vmatprep.subr.mxu0 0.0
    %60 = vmatpush1.msra.mxu0 0.0
    %61 = vmatprep.subr.mxu0 0.0
    %62 = vmatpush1.msra.mxu0 0.0
    %63 = vmatprep.subr.mxu0 0.0
    %64 = vmatpush1.msra.mxu0 0.0
    %65 = vmatprep.subr.mxu0 0.0
    %66 = vmatpush1.msra.mxu0 0.0
    %67 = vmatprep.subr.mxu0 0.0
    %68 = vmatpush1.msra.mxu0 0.0
    %69 = vmatprep.subr.mxu0 0.0
    %70 = vmatpush1.msra.mxu0 0.0
    %71 = vmatprep.subr.mxu0 0.0
    %72 = vmatpush1.msra.mxu0 0.0
    %73 = vmatprep.subr.mxu0 0.0
    %74 = vmatpush1.msra.mxu0 0.0
    %75 = vmatprep.subr.mxu0 0.0
    %76 = vmatpush1.msra.mxu0 0.0
    %77 = vmatprep.subr.mxu0 0.0
    %78 = vmatpush1.msra.mxu0 0.0
    %79 = vmatprep.subr.mxu0 0.0
    %80 = vmatpush1.msra.mxu0 0.0
    %81 = vmatprep.subr.mxu0 0.0
    %82 = vmatpush1.msra.mxu0 %v45
    %83 = vmatprep.subr.mxu0 0.0
    %84 = vmatpush1.msra.mxu0 %v44
    %85 = vmatprep.subr.mxu0 0.0
    %86 = vmatpush1.msra.mxu0 %v43
    %87 = vmatprep.subr.mxu0 0.0
    %88 = vmatpush1.msra.mxu0 %v42
    %89 = vmatprep.subr.mxu0 0.0
    %90 = vmatpush2.msra.mxu0 0.0
    %91 = vmatprep.subr.mxu0 0.0
    %92 = vmatpush2.msra.mxu0 0.0
    %93 = vmatprep.subr.mxu0 0.0
    %94 = vmatpush2.msra.mxu0 0.0
    %95 = vmatprep.subr.mxu0 0.0
    %96 = vmatpush2.msra.mxu0 0.0
    %97 = vmatprep.subr.mxu0 0.0
    %98 = vmatpush2.msra.mxu0 0.0
    %99 = vmatprep.subr.mxu0 0.0
    %100 = vmatpush2.msra.mxu0 0.0
    %101 = vmatprep.subr.mxu0 0.0
    %102 = vmatpush2.msra.mxu0 0.0
    %103 = vmatprep.subr.mxu0 0.0
    %104 = vmatpush2.msra.mxu0 0.0
    %105 = vmatprep.subr.mxu0 0.0
    %106 = vmatpush2.msra.mxu0 0.0
    %107 = vmatprep.subr.mxu0 0.0
    %108 = vmatpush2.msra.mxu0 0.0
    %109 = vmatprep.subr.mxu0 0.0
    %110 = vmatpush2.msra.mxu0 0.0
    %111 = vmatprep.subr.mxu0 0.0
    %112 = vmatpush2.msra.mxu0 0.0
    %113 = vmatprep.subr.mxu0 0.0
    %114 = vmatpush2.msra.mxu0 0.0
    %115 = vmatprep.subr.mxu0 0.0
    %116 = vmatpush2.msra.mxu0 0.0
    %117 = vmatprep.subr.mxu0 0.0
    %118 = vmatpush2.msra.mxu0 0.0
    %119 = vmatprep.subr.mxu0 0.0
    %120 = vmatpush2.msra.mxu0 0.0
    %121 = vmatprep.mubr.f32.mxu0 0.0
    %122 = vmatmul.mubr.f32.gmra.mxu0 %v55
    %v123 = vpop.f32.mrf.mxu0
    %v124 = vadd.f32 %v51, %v123
    %v125 = vpop.f32.mrf.mxu0
    %126 = vdwg.mxu0
    %127 = vmax.xlane.f32.xlu0 %v124
    %v128 = vpop.xlane.xlu0 %127
    %v129 = vsub.f32 %v124, %v128
    %v130 = vmul.f32 %v129, 1.442695
    %v131 = vpow.pop %v130
    %132 = vadd.xlane.f32.xlu0 %v131
    %v133 = vpop.xlane.xlu0 %132
    %v134 = vrcp.pop %v133
    %v135 = vmul.f32 %v131, %v134
    %136 = vst [vmem:[#allocation7] sm:$0xff] %v135
    // Predicated region
    $region22: #{toy_model_forward_padded.1} parent=1 // pred_check
      _
    $region23: #{toy_model_forward_padded.1} parent=1 // pred_check_branch
      %138 = sbr.rel (0) target = $region25
    $region24: #{toy_model_forward_padded.1} parent=1 // pred_region
      %s140 = ssub.s32 128, 128
      %141 = vsyncadd [#allocation4], %s140
      %s143 = sshll.u32 [#allocation7], 4
      %s144 = int_to_ptr.vmem [resolvable:$true] %s143
      %146 = dma.vmem_to_hbm [thread:$0]  %s144, 128, %s3, [#allocation4]
    $region25: #{toy_model_forward_padded.1} parent=1 // pred_fallthru
      _
    // Predicated region
    $region26: #{toy_model_forward_padded.1} parent=1 // pred_check
      _
    $region27: #{toy_model_forward_padded.1} parent=1 // pred_check_branch
      %148 = sbr.rel (0) target = $region29
    $region28: #{toy_model_forward_padded.1} parent=1 // pred_region
      %149 = dma.done [#allocation4], 128
    $region29: #{toy_model_forward_padded.1} parent=1 // pred_fallthru
      _
    %150 = vsyncpa [#allocation3], 1
    %151 = vsyncpa [#allocation6], 1
    %152 = vsyncpa [#allocation4], 1

</llo_original>
